<compile_context>
chip_gen: v5e
topology: v5e:2x2
jax: 0.10.0
libtpu: 0.0.40
codegen_flags: <defaults>
</compile_context>

<pallas_src>
import math

import jax
import jax.numpy as jnp
from jax import lax
from jax.experimental import pallas as pl
from jax.experimental.pallas import tpu as pltpu

_GELU_C = math.sqrt(2.0 / math.pi)


def _round_up(a, b):
    return ((a + b - 1) // b) * b


def _bytes(shape, dt):
    n = 1
    for s in shape:
        n *= s
    return n * jnp.dtype(dt).itemsize


def _chip_config():
    """Per-generation tile targets and VMEM budgets."""
    vmem_cap = 128 * 2**20
    try:
        info = pltpu.get_tpu_info()
        vmem_cap = int(getattr(info, "vmem_capacity_bytes", vmem_cap) or vmem_cap)
    except Exception:
        pass
    kind = ""
    try:
        kind = jax.devices()[0].device_kind.lower()
    except Exception:
        pass

    small_vmem = vmem_cap <= 80 * 2**20        # v7x-like: 64 MiB per TensorCore
    is_v5e = ("v5e" in kind) or ("v5 lite" in kind) or ("v5litepod" in kind)

    if small_vmem:
        # v7x: 2 TCs share the grid's "parallel" axis; ridge ~310 flop/B.
        return dict(tm=512, tnx=512, budget=44 * 2**20,
                    limit_cap=48 * 2**20, two_row_tiles=True)
    if is_v5e:
        # v5e: single vector-store slot -> fewer, fatter k steps; tm=256 is
        # already past its ~240 flop/B ridge.
        return dict(tm=256, tnx=1024, budget=96 * 2**20,
                    limit_cap=112 * 2**20, two_row_tiles=False)
    # v6e / default: push weight reuse past the ~680 flop/B ridge.
    return dict(tm=768, tnx=512, budget=96 * 2**20,
                limit_cap=112 * 2**20, two_row_tiles=False)


def _est_tiled(tm, tnx, n_state, dt_x, dt_w):
    """VMEM bytes for one step of the hidden-dim-tiled path (incl. temporaries)."""
    e = 0
    e += 2 * _bytes((tm, n_state), dt_x)          # x blocks (double buffered)
    e += 2 * _bytes((tm, n_state), dt_x)          # out blocks
    e += 2 * _bytes((tnx, n_state), dt_w)         # W1 slice
    e += 2 * _bytes((n_state, tnx), dt_w)         # W2 slice
    e += 2 * (_bytes((1, tnx), dt_w) + _bytes((1, n_state), dt_w))
    e += _bytes((tm, n_state), jnp.float32)       # f32 accumulator scratch
    e += _bytes((tm, tnx), jnp.float32)           # materialized GELU'd h tile
    e += _bytes((tm, tnx), dt_w)                  # h cast copy for 2nd matmul
    return int(e * 1.15) + (2 << 20)              # MXU staging / Mosaic slack


def _est_resident(tm, n_state, nx, dt_x, dt_w):
    """VMEM bytes for the weights-resident path (incl. temporaries)."""
    e = 0
    e += 2 * _bytes((tm, n_state), dt_x)          # x blocks
    e += 2 * _bytes((tm, n_state), dt_x)          # out blocks
    e += 2 * _bytes((nx, n_state), dt_w)          # W1 (conservatively 2 bufs)
    e += 2 * _bytes((n_state, nx), dt_w)          # W2
    e += 2 * (_bytes((1, nx), dt_w) + _bytes((1, n_state), dt_w))
    e += _bytes((tm, nx), jnp.float32)            # f32 hidden tile
    e += _bytes((tm, nx), dt_w)                   # cast copy for 2nd matmul
    e += _bytes((tm, n_state), jnp.float32)       # f32 result before final cast
    return int(e * 1.15) + (2 << 20)


def _gelu_f32(h):
    # tanh-approx GELU in f32 (matches the reference gelu()).
    return 0.5 * h * (1.0 + jnp.tanh(jnp.float32(_GELU_C)
                                     * (h + 0.044715 * (h * h * h))))


def _ffn_kernel_tiled(x_ref, w1_ref, b1_ref, w2_ref, b2_ref, o_ref, acc_ref):
    """One (tm rows) x (tnx hidden-slice) step with an f32 VMEM accumulator."""
    k = pl.program_id(1)

    @pl.when(k == 0)
    def _():
        acc_ref[...] = jnp.zeros_like(acc_ref)

    x = x_ref[...]
    w1 = w1_ref[...]

    # h = x @ W1^T + b1 : NT matmul (torch layout, no transpose copy).
    h = lax.dot_general(x, w1, (((1,), (1,)), ((), ())),
                        preferred_element_type=jnp.float32)
    h = _gelu_f32(h + b1_ref[...].astype(jnp.float32))

    # Partial c_proj for this hidden slice: acc += h @ W2_slice^T.
    w2 = w2_ref[...]
    acc_ref[...] += lax.dot_general(h.astype(w2.dtype), w2,
                                    (((1,), (1,)), ((), ())),
                                    preferred_element_type=jnp.float32)

    @pl.when(k == pl.num_programs(1) - 1)
    def _():
        o_ref[...] = (acc_ref[...]
                      + b2_ref[...].astype(jnp.float32)).astype(o_ref.dtype)


def _ffn_kernel_resident(x_ref, w1_ref, b1_ref, w2_ref, b2_ref, o_ref):
    """Weights fully resident in VMEM: no hidden-dim loop, no accumulator."""
    x = x_ref[...]
    w1 = w1_ref[...]
    h = lax.dot_general(x, w1, (((1,), (1,)), ((), ())),
                        preferred_element_type=jnp.float32)
    h = _gelu_f32(h + b1_ref[...].astype(jnp.float32))
    w2 = w2_ref[...]
    out = lax.dot_general(h.astype(w2.dtype), w2, (((1,), (1,)), ((), ())),
                          preferred_element_type=jnp.float32)
    o_ref[...] = (out + b2_ref[...].astype(jnp.float32)).astype(o_ref.dtype)


def ffn_pallas(x, w_fc, b_fc, w_proj, b_proj, *, tm=None, tnx=None,
               weights_resident=None):
    """Fused FFN forward.

    x      : [B, T, n_state]
    w_fc   : (nx, n_state)   c_fc.weight   (torch nn.Linear layout)
    b_fc   : (nx,)           c_fc.bias
    w_proj : (n_state, nx)   c_proj.weight
    b_proj : (n_state,)      c_proj.bias
    tm/tnx : optional tile overrides (None = per-chip auto).
    weights_resident : None = auto, True/False = force path.
    """
    B, T, n_state = x.shape
    nx, n_state_in = w_fc.shape
    assert n_state_in == n_state and w_proj.shape == (n_state, nx)
    assert b_fc.shape == (nx,) and b_proj.shape == (n_state,)

    cfg = _chip_config()
    M = B * T
    x2d = x.reshape(M, n_state)
    dt_x = x2d.dtype
    dt_w = w_fc.dtype

    # ---- row tiling ------------------------------------------------------
    target_tm = tm if tm is not None else cfg["tm"]
    if tm is None and cfg["two_row_tiles"] and M >= 16:
        # Keep at least 2 row tiles so both v7x TensorCores get work.
        target_tm = min(target_tm, _round_up(-(-M // 2), 8))
    target_tm = max(8, min(target_tm, _round_up(M, 8)))

    # Hidden-dim target (used by the tiled path and for budget fitting).
    tnx_target = tnx if tnx is not None else cfg["tnx"]
    tnx_target = max(128, min(_round_up(tnx_target, 128), _round_up(nx, 128)))

    # Fit (tm, tnx) to the per-generation VMEM budget (auto dims only).
    if tm is None or tnx is None:
        while _est_tiled(target_tm, tnx_target, n_state, dt_x, dt_w) > cfg["budget"]:
            if tnx is None and tnx_target > 128:
                tnx_target = max(128, _round_up(tnx_target // 2, 128))
            elif tm is None and target_tm > 128:
                target_tm = max(128, target_tm - 128)
            else:
                break

    # Minimize row padding: keep the tile count, shrink tm to what is needed.
    n_row_tiles = max(1, -(-M // target_tm))
    tm_eff = _round_up(-(-M // n_row_tiles), 8)
    Mp = n_row_tiles * tm_eff
    if Mp != M:
        x2d = jnp.pad(x2d, ((0, Mp - M), (0, 0)))

    b1 = b_fc.reshape(1, nx)
    b2 = b_proj.reshape(1, n_state)

    # ---- path selection --------------------------------------------------
    est_res = _est_resident(tm_eff, n_state, nx, dt_x, dt_w)
    if weights_resident is None:
        use_resident = (tnx is None) and (est_res <= cfg["budget"])
    else:
        use_resident = bool(weights_resident)

    if use_resident:
        vmem_limit = int(min(cfg["limit_cap"],
                             max(32 * 2**20, est_res + (4 << 20))))
        cost = pl.CostEstimate(
            flops=int(4 * Mp * n_state * nx),
            transcendentals=int(Mp * nx),
            bytes_accessed=int(x2d.size * x2d.dtype.itemsize
                               + w_fc.size * w_fc.dtype.itemsize
                               + w_proj.size * w_proj.dtype.itemsize
                               + b1.size * b1.dtype.itemsize
                               + b2.size * b2.dtype.itemsize
                               + Mp * n_state * x2d.dtype.itemsize),
        )
        out2d = pl.pallas_call(
            _ffn_kernel_resident,
            out_shape=jax.ShapeDtypeStruct((Mp, n_state), x.dtype),
            grid_spec=pltpu.PrefetchScalarGridSpec(
                num_scalar_prefetch=0,
                grid=(n_row_tiles,),
                in_specs=[
                    pl.BlockSpec((tm_eff, n_state), lambda i: (i, 0)),  # x rows
                    pl.BlockSpec((nx, n_state), lambda i: (0, 0)),      # W1 (resident)
                    pl.BlockSpec((1, nx), lambda i: (0, 0)),            # b1
                    pl.BlockSpec((n_state, nx), lambda i: (0, 0)),      # W2 (resident)
                    pl.BlockSpec((1, n_state), lambda i: (0, 0)),       # b2
                ],
                out_specs=pl.BlockSpec((tm_eff, n_state), lambda i: (i, 0)),
            ),
            compiler_params=pltpu.CompilerParams(
                dimension_semantics=("parallel",),
                vmem_limit_bytes=vmem_limit,
            ),
            cost_estimate=cost,
        )(x2d, w_fc, b1, w_proj, b2)
        return out2d[:M].reshape(B, T, n_state)

    # ---- hidden-dim-tiled path (large models) ----------------------------
    tnx_eff = tnx_target
    nxp = _round_up(nx, tnx_eff)
    w1p, w2p, b1p = w_fc, w_proj, b1
    if nxp != nx:
        # Zero-padded hidden units contribute exactly zero (gelu(0) == 0 and
        # the padded W2 columns are zero).
        w1p = jnp.pad(w1p, ((0, nxp - nx), (0, 0)))
        w2p = jnp.pad(w2p, ((0, 0), (0, nxp - nx)))
        b1p = jnp.pad(b1p, ((0, 0), (0, nxp - nx)))

    grid = (n_row_tiles, nxp // tnx_eff)

    est = _est_tiled(tm_eff, tnx_eff, n_state, dt_x, dt_w)
    vmem_limit = int(min(cfg["limit_cap"], max(32 * 2**20, est + (4 << 20))))

    cost = pl.CostEstimate(
        flops=int(4 * Mp * n_state * nxp),
        transcendentals=int(Mp * nxp),
        bytes_accessed=int(
            x2d.size * x2d.dtype.itemsize
            # weight slices are re-streamed once per row tile:
            + n_row_tiles * (w1p.size * w1p.dtype.itemsize
                             + w2p.size * w2p.dtype.itemsize
                             + b1p.size * b1p.dtype.itemsize)
            + b2.size * b2.dtype.itemsize
            + Mp * n_state * x2d.dtype.itemsize),
    )

    out2d = pl.pallas_call(
        _ffn_kernel_tiled,
        out_shape=jax.ShapeDtypeStruct((Mp, n_state), x.dtype),
        grid_spec=pltpu.PrefetchScalarGridSpec(
            num_scalar_prefetch=0,
            grid=grid,
            in_specs=[
                pl.BlockSpec((tm_eff, n_state), lambda i, k: (i, 0)),   # x rows
                pl.BlockSpec((tnx_eff, n_state), lambda i, k: (k, 0)),  # W1 slice
                pl.BlockSpec((1, tnx_eff), lambda i, k: (0, k)),        # b1 slice
                pl.BlockSpec((n_state, tnx_eff), lambda i, k: (0, k)),  # W2 slice
                pl.BlockSpec((1, n_state), lambda i, k: (0, 0)),        # b2
            ],
            out_specs=pl.BlockSpec((tm_eff, n_state), lambda i, k: (i, 0)),
            scratch_shapes=[pltpu.VMEM((tm_eff, n_state), jnp.float32)],
        ),
        compiler_params=pltpu.CompilerParams(
            dimension_semantics=("parallel", "arbitrary"),
            vmem_limit_bytes=vmem_limit,
        ),
        cost_estimate=cost,
    )(x2d, w1p, b1p, w2p, b2)

    return out2d[:M].reshape(B, T, n_state)


def ffn_reference(x, w_fc, b_fc, w_proj, b_proj):
    xf = x.astype(jnp.float32)
    h = jnp.einsum("btk,nk->btn", xf, w_fc.astype(jnp.float32)) + b_fc.astype(jnp.float32)
    h = 0.5 * h * (1.0 + jnp.tanh(_GELU_C * (h + 0.044715 * h ** 3)))
    return (jnp.einsum("btn,kn->btk", h, w_proj.astype(jnp.float32))
            + b_proj.astype(jnp.float32))


def _make_params(key, n_state, nx, dtype):
    k1, k2, k3, k4 = jax.random.split(key, 4)
    w_fc = (jax.random.normal(k1, (nx, n_state), dtype=jnp.float32) * 0.02).astype(dtype)
    b_fc = (jax.random.normal(k2, (nx,), dtype=jnp.float32) * 0.02).astype(dtype)
    w_proj = (jax.random.normal(k3, (n_state, nx), dtype=jnp.float32) * 0.02).astype(dtype)
    b_proj = (jax.random.normal(k4, (n_state,), dtype=jnp.float32) * 0.02).astype(dtype)
    return w_fc, b_fc, w_proj, b_proj


if __name__ == "__main__":
    key = jax.random.PRNGKey(0)

    # --- Test 1: small shapes (n_state=32, nx=64), f32, weights-resident path.
    B, T, n_state, nx = 2, 8, 32, 64
    kx, kp = jax.random.split(key)
    x = jax.random.normal(kx, (B, T, n_state), dtype=jnp.float32)
    w_fc, b_fc, w_proj, b_proj = _make_params(kp, n_state, nx, jnp.float32)
    out = jax.block_until_ready(ffn_pallas(x, w_fc, b_fc, w_proj, b_proj))
    ref = ffn_reference(x, w_fc, b_fc, w_proj, b_proj)
    assert out.shape == (B, T, n_state)
    assert jnp.allclose(out, ref, atol=1e-5, rtol=1e-5)

    # --- Test 2: force the hidden-dim-tiled path (reduction grid axis + acc).
    n_state2, nx2 = 128, 512
    kx2, kp2 = jax.random.split(kp)
    x2 = jax.random.normal(kx2, (B, T, n_state2), dtype=jnp.float32)
    w_fc2, b_fc2, w_proj2, b_proj2 = _make_params(kp2, n_state2, nx2, jnp.float32)
    out2 = jax.block_until_ready(
        ffn_pallas(x2, w_fc2, b_fc2, w_proj2, b_proj2,
                   tnx=128, weights_resident=False))
    ref2 = ffn_reference(x2, w_fc2, b_fc2, w_proj2, b_proj2)
    assert out2.shape == (B, T, n_state2)
    assert jnp.allclose(out2, ref2, atol=1e-4, rtol=1e-4)

    # --- Test 3: bf16 operands (production dtype), loose mixed-precision tol.
    x3 = x.astype(jnp.bfloat16)
    w_fc3, b_fc3, w_proj3, b_proj3 = _make_params(kp, n_state, nx, jnp.bfloat16)
    out3 = jax.block_until_ready(ffn_pallas(x3, w_fc3, b_fc3, w_proj3, b_proj3))
    ref3 = ffn_reference(x3, w_fc3, b_fc3, w_proj3, b_proj3)
    assert out3.shape == (B, T, n_state)
    assert jnp.allclose(out3.astype(jnp.float32), ref3, atol=5e-2, rtol=5e-2)

    print("KERNEL_OK")
</pallas_src>

<mosaic_0001>
module attributes {stable_mosaic.version = 11 : i64} {
  func.func @_ffn_kernel_resident(%arg0: i32, %arg1: memref<16x32xf32, #tpu.memory_space<vmem>>, %arg2: memref<64x32xf32, #tpu.memory_space<vmem>>, %arg3: memref<1x64xf32, #tpu.memory_space<vmem>>, %arg4: memref<32x64xf32, #tpu.memory_space<vmem>>, %arg5: memref<1x32xf32, #tpu.memory_space<vmem>>, %arg6: memref<16x32xf32, #tpu.memory_space<vmem>>) attributes {dimension_semantics = [#tpu.dimension_semantics<parallel>], iteration_bounds = array<i64: 1>, scalar_prefetch = 0 : i64, scratch_operands = 0 : i64, tpu.core_type = #tpu.core_type<tc>, window_params = [{transform_indices = @transform_0, window_bounds = array<i64: 16, 32>}, {pipeline_mode = #tpu.pipeline_mode<synchronous>, transform_indices = @transform_1, window_bounds = array<i64: 64, 32>}, {pipeline_mode = #tpu.pipeline_mode<synchronous>, transform_indices = @transform_2, window_bounds = array<i64: 1, 64>}, {pipeline_mode = #tpu.pipeline_mode<synchronous>, transform_indices = @transform_3, window_bounds = array<i64: 32, 64>}, {pipeline_mode = #tpu.pipeline_mode<synchronous>, transform_indices = @transform_4, window_bounds = array<i64: 1, 32>}, {transform_indices = @transform_5, window_bounds = array<i64: 16, 32>}]} {
    %c0 = arith.constant 0 : index
    %c0_0 = arith.constant 0 : index
    %0 = vector.load %arg1[%c0, %c0_0] : memref<16x32xf32, #tpu.memory_space<vmem>>, vector<16x32xf32>
    %c0_1 = arith.constant 0 : index
    %c0_2 = arith.constant 0 : index
    %1 = vector.load %arg2[%c0_1, %c0_2] : memref<64x32xf32, #tpu.memory_space<vmem>>, vector<64x32xf32>
    %cst = arith.constant dense<0.000000e+00> : vector<16x64xf32>
    %2 = tpu.matmul %0, %1, %cst {dimension_numbers = #tpu.dot_dimension_numbers<[1], [1], [0], [0], [0, 0, 1, 0], [], []>} : vector<16x32xf32>, vector<64x32xf32>, vector<16x64xf32> -> vector<16x64xf32>
    %c0_3 = arith.constant 0 : index
    %c0_4 = arith.constant 0 : index
    %3 = vector.load %arg3[%c0_3, %c0_4] : memref<1x64xf32, #tpu.memory_space<vmem>>, vector<1x64xf32>
    %4 = vector.broadcast %3 : vector<1x64xf32> to vector<16x64xf32>
    %5 = arith.addf %2, %4 : vector<16x64xf32>
    %cst_5 = arith.constant 5.000000e-01 : f32
    %6 = vector.broadcast %cst_5 : f32 to vector<16x64xf32>
    %7 = arith.mulf %6, %5 : vector<16x64xf32>
    %8 = arith.mulf %5, %5 : vector<16x64xf32>
    %9 = arith.mulf %8, %5 : vector<16x64xf32>
    %cst_6 = arith.constant 4.471500e-02 : f32
    %10 = vector.broadcast %cst_6 : f32 to vector<16x64xf32>
    %11 = arith.mulf %10, %9 : vector<16x64xf32>
    %12 = arith.addf %5, %11 : vector<16x64xf32>
    %cst_7 = arith.constant 0.797884583 : f32
    %13 = vector.broadcast %cst_7 : f32 to vector<16x64xf32>
    %14 = arith.mulf %13, %12 : vector<16x64xf32>
    %15 = math.tanh %14 : vector<16x64xf32>
    %cst_8 = arith.constant 1.000000e+00 : f32
    %16 = vector.broadcast %cst_8 : f32 to vector<16x64xf32>
    %17 = arith.addf %16, %15 : vector<16x64xf32>
    %18 = arith.mulf %7, %17 : vector<16x64xf32>
    %c0_9 = arith.constant 0 : index
    %c0_10 = arith.constant 0 : index
    %19 = vector.load %arg4[%c0_9, %c0_10] : memref<32x64xf32, #tpu.memory_space<vmem>>, vector<32x64xf32>
    %cst_11 = arith.constant dense<0.000000e+00> : vector<16x32xf32>
    %20 = tpu.matmul %18, %19, %cst_11 {dimension_numbers = #tpu.dot_dimension_numbers<[1], [1], [0], [0], [0, 0, 1, 0], [], []>} : vector<16x64xf32>, vector<32x64xf32>, vector<16x32xf32> -> vector<16x32xf32>
    %c0_12 = arith.constant 0 : index
    %c0_13 = arith.constant 0 : index
    %21 = vector.load %arg5[%c0_12, %c0_13] : memref<1x32xf32, #tpu.memory_space<vmem>>, vector<1x32xf32>
    %22 = vector.broadcast %21 : vector<1x32xf32> to vector<16x32xf32>
    %23 = arith.addf %20, %22 : vector<16x32xf32>
    %c0_14 = arith.constant 0 : index
    %c0_15 = arith.constant 0 : index
    %24 = vector.load %arg6[%c0_14, %c0_15] : memref<16x32xf32, #tpu.memory_space<vmem>>, vector<16x32xf32>
    tpu.vector_store %arg6[%c0_14, %c0_15], %23 {strides = array<i32>} : memref<16x32xf32, #tpu.memory_space<vmem>>, vector<16x32xf32>,
    return
  }
  func.func @transform_0(%arg0: i32) -> (i32, i32) {
    %c0_i32 = arith.constant 0 : i32
    %c0_i32_0 = arith.constant 0 : i32
    return %arg0, %c0_i32 : i32, i32
  }
  func.func @transform_1(%arg0: i32) -> (i32, i32) {
    %c0_i32 = arith.constant 0 : i32
    %c0_i32_0 = arith.constant 0 : i32
    %c0_i32_1 = arith.constant 0 : i32
    return %c0_i32, %c0_i32_0 : i32, i32
  }
  func.func @transform_2(%arg0: i32) -> (i32, i32) {
    %c0_i32 = arith.constant 0 : i32
    %c0_i32_0 = arith.constant 0 : i32
    %c0_i32_1 = arith.constant 0 : i32
    return %c0_i32, %c0_i32_0 : i32, i32
  }
  func.func @transform_3(%arg0: i32) -> (i32, i32) {
    %c0_i32 = arith.constant 0 : i32
    %c0_i32_0 = arith.constant 0 : i32
    %c0_i32_1 = arith.constant 0 : i32
    return %c0_i32, %c0_i32_0 : i32, i32
  }
  func.func @transform_4(%arg0: i32) -> (i32, i32) {
    %c0_i32 = arith.constant 0 : i32
    %c0_i32_0 = arith.constant 0 : i32
    %c0_i32_1 = arith.constant 0 : i32
    return %c0_i32, %c0_i32_0 : i32, i32
  }
  func.func @transform_5(%arg0: i32) -> (i32, i32) {
    %c0_i32 = arith.constant 0 : i32
    %c0_i32_0 = arith.constant 0 : i32
    return %arg0, %c0_i32 : i32, i32
  }
}

</mosaic_0001>

<llo_original>
// kernel: tpu_custom_call.1
$region0: #{tpu_custom_call.1}
  #allocation0 [shape = 'u32[]', space=smem, size = 0x4, offset = 0x4, fixed_abs, tag = 'smem constant byte address 0x4 - core index']
  #allocation1 [shape = 'u32[72,128]{1,0:T(1,128)}', space=vmem, size = 0x9000, scoped, tag = 'internal scratch']
  %s0 = inlined_call_operand.vmem [shape: f32[16,32], index: 0, kind: input, shape index: {}]
  %s1 = inlined_call_operand.vmem [shape: f32[64,32], index: 1, kind: input, shape index: {}]
  %s2 = inlined_call_operand.vmem [shape: f32[1,64], index: 2, kind: input, shape index: {}]
  %s3 = inlined_call_operand.vmem [shape: f32[32,64], index: 3, kind: input, shape index: {}]
  %s4 = inlined_call_operand.vmem [shape: f32[1,32], index: 4, kind: input, shape index: {}]
  %s5 = inlined_call_operand.hbm [shape: f32[16,32], index: 5, kind: output, shape index: {}]
  %s6 = sld [smem:[#allocation0]]
  $region30: #{tpu_custom_call.1} parent=0
    _
  %s8 = ssub.s32 1, %s6
  %s9 = scalar_select 0, %s8, %s6
  $region1: #{tpu_custom_call.1} parent=0
    #allocation2 [shape = 'u8[8192]{0}', space=vmem, size = 0x2000, scoped, tag = 'output window, operand 0, single buffered']
    #allocation3 [shape = 's32[1]{0}', space=sflag, size = 0x4, scoped, tag = 'scoped memory for tpu_custom_call.1']
    %10 = vsyncpa [#allocation3], 0
    // Predicated region
    $region2: #{tpu_custom_call.1} parent=1 // pred_check
      _
    $region3: #{tpu_custom_call.1} parent=1 // pred_check_branch
      %12 = sbr.rel (0) target = $region5
    $region4: #{tpu_custom_call.1} parent=1 // pred_region
      _
    $region5: #{tpu_custom_call.1} parent=1 // pred_fallthru
      _
    // Predicated region
    $region6: #{tpu_custom_call.1} parent=1 // pred_check
      _
    $region7: #{tpu_custom_call.1} parent=1 // pred_check_branch
      %14 = sbr.rel (0) target = $region9
    $region8: #{tpu_custom_call.1} parent=1 // pred_region
      _
    $region9: #{tpu_custom_call.1} parent=1 // pred_fallthru
      _
    // Predicated region
    $region10: #{tpu_custom_call.1} parent=1 // pred_check
      _
    $region11: #{tpu_custom_call.1} parent=1 // pred_check_branch
      %16 = sbr.rel (0) target = $region13
    $region12: #{tpu_custom_call.1} parent=1 // pred_region
      _
    $region13: #{tpu_custom_call.1} parent=1 // pred_fallthru
      _
    // Predicated region
    $region14: #{tpu_custom_call.1} parent=1 // pred_check
      _
    $region15: #{tpu_custom_call.1} parent=1 // pred_check_branch
      %18 = sbr.rel (0) target = $region17
    $region16: #{tpu_custom_call.1} parent=1 // pred_region
      _
    $region17: #{tpu_custom_call.1} parent=1 // pred_fallthru
      _
    // Predicated region
    $region18: #{tpu_custom_call.1} parent=1 // pred_check
      _
    $region19: #{tpu_custom_call.1} parent=1 // pred_check_branch
      %20 = sbr.rel (0) target = $region21
    $region20: #{tpu_custom_call.1} parent=1 // pred_region
      _
    $region21: #{tpu_custom_call.1} parent=1 // pred_fallthru
      _
    %v21 = vld [vmem:[%s0] sm:$0xff]
    %v22 = vld [vmem:[%s0 + $0x8] sm:$0xff]
    %v23 = vld [vmem:[%s1] sm:$0xff]
    %v24 = vld [vmem:[%s1 + $0x8] sm:$0xff]
    %v25 = vld [vmem:[%s1 + $0x10] sm:$0xff]
    %v26 = vld [vmem:[%s1 + $0x18] sm:$0xff]
    %v27 = vld [vmem:[%s1 + $0x20] sm:$0xff]
    %v28 = vld [vmem:[%s1 + $0x28] sm:$0xff]
    %v29 = vld [vmem:[%s1 + $0x30] sm:$0xff]
    %v30 = vld [vmem:[%s1 + $0x38] sm:$0xff]
    %v31 = vld [vmem:[%s2] sm:$0x1]
    %v33 = vperm.slane %v31, 0
    %vm35 = vcmask 261120
    %v37 = vsel %vm35, %v21, 0
    %v40 = vsel %vm35, %v22, 0
    %v43 = vsel %vm35, %v23, 0
    %v46 = vsel %vm35, %v24, 0
    %v49 = vsel %vm35, %v25, 0
    %v52 = vsel %vm35, %v26, 0
    %v55 = vsel %vm35, %v27, 0
    %v58 = vsel %vm35, %v28, 0
    %v61 = vsel %vm35, %v29, 0
    %v64 = vsel %vm35, %v30, 0
    %66 = vmatpush.xpose.msra.mxu0 0.0
    %67 = vmatpush.xpose.msra.mxu0 0.0
    %68 = vmatpush.xpose.msra.mxu0 0.0
    %69 = vmatpush.xpose.msra.mxu0 0.0
    %70 = vmatpush.xpose.msra.mxu0 0.0
    %71 = vmatpush.xpose.msra.mxu0 0.0
    %72 = vmatpush.xpose.msra.mxu0 0.0
    %73 = vmatpush.xpose.msra.mxu0 0.0
    %74 = vmatpush.xpose.msra.mxu0 %v64
    %75 = vmatpush.xpose.msra.mxu0 %v61
    %76 = vmatpush.xpose.msra.mxu0 %v58
    %77 = vmatpush.xpose.msra.mxu0 %v55
    %78 = vmatpush.xpose.msra.mxu0 %v52
    %79 = vmatpush.xpose.msra.mxu0 %v49
    %80 = vmatpush.xpose.msra.mxu0 %v46
    %81 = vmatpush.xpose.msra.mxu0 %v43
    %82 = vmatmul.f32.gmra.mxu0 %v37
    %v83 = vpop.f32.mrf.mxu0
    %v84 = vadd.f32 %v33, %v83
    %85 = vmatmul.f32.gmra.mxu0 %v40
    %v86 = vpop.f32.mrf.mxu0
    %v87 = vadd.f32 %v33, %v86
    %88 = vdwg.mxu0
    %v89 = vmul.f32 %v84, 0.5
    %v90 = vmul.f32 %v87, 0.5
    %v91 = vmul.f32 %v84, %v84
    %v92 = vmul.f32 %v87, %v87
    %v93 = vmul.f32 %v91, %v84
    %v94 = vmul.f32 %v92, %v87
    %v95 = vmul.f32 %v93, 0.044715
    %v96 = vmul.f32 %v94, 0.044715
    %v97 = vadd.f32 %v84, %v95
    %v98 = vadd.f32 %v87, %v96
    %v99 = vmul.f32 %v97, 0.7978846
    %v100 = vmul.f32 %v98, 0.7978846
    %v101 = vtanh.pop %v99
    %v102 = vtanh.pop %v100
    %v103 = vadd.f32 %v101, 1.0
    %v104 = vadd.f32 %v102, 1.0
    %v105 = vmul.f32 %v89, %v103
    %v106 = vmul.f32 %v90, %v104
    %v107 = vld [vmem:[%s3] sm:$0xff]
    %v108 = vld [vmem:[%s3 + $0x8] sm:$0xff]
    %v109 = vld [vmem:[%s3 + $0x10] sm:$0xff]
    %v110 = vld [vmem:[%s3 + $0x18] sm:$0xff]
    %v111 = vld [vmem:[%s4] sm:$0x1]
    %v113 = vperm.slane %v111, 0
    %vm115 = vcmask 523264
    %v117 = vsel %vm115, %v105, 0
    %v120 = vsel %vm115, %v106, 0
    %v123 = vsel %vm115, %v107, 0
    %v126 = vsel %vm115, %v108, 0
    %v129 = vsel %vm115, %v109, 0
    %v132 = vsel %vm115, %v110, 0
    %134 = vmatpush.xpose.msra.mxu0 0.0
    %135 = vmatpush.xpose.msra.mxu0 0.0
    %136 = vmatpush.xpose.msra.mxu0 0.0
    %137 = vmatpush.xpose.msra.mxu0 0.0
    %138 = vmatpush.xpose.msra.mxu0 0.0
    %139 = vmatpush.xpose.msra.mxu0 0.0
    %140 = vmatpush.xpose.msra.mxu0 0.0
    %141 = vmatpush.xpose.msra.mxu0 0.0
    %142 = vmatpush.xpose.msra.mxu0 0.0
    %143 = vmatpush.xpose.msra.mxu0 0.0
    %144 = vmatpush.xpose.msra.mxu0 0.0
    %145 = vmatpush.xpose.msra.mxu0 0.0
    %146 = vmatpush.xpose.msra.mxu0 %v132
    %147 = vmatpush.xpose.msra.mxu0 %v129
    %148 = vmatpush.xpose.msra.mxu0 %v126
    %149 = vmatpush.xpose.msra.mxu0 %v123
    %150 = vmatmul.f32.gmra.mxu0 %v117
    %v151 = vpop.f32.mrf.mxu0
    %v152 = vadd.f32 %v113, %v151
    %153 = vmatmul.f32.gmra.mxu0 %v120
    %v154 = vpop.f32.mrf.mxu0
    %v155 = vadd.f32 %v113, %v154
    %156 = vdwg.mxu0
    %157 = vst.msk [vmem:[#allocation2] sm:$0xff] %vm35, %v152
    %158 = vst.msk [vmem:[#allocation2 + $0x8] sm:$0xff] %vm35, %v155
    // Predicated region
    $region22: #{tpu_custom_call.1} parent=1 // pred_check
      _
    $region23: #{tpu_custom_call.1} parent=1 // pred_check_branch
      %160 = sbr.rel (0) target = $region25
    $region24: #{tpu_custom_call.1} parent=1 // pred_region
      %162 = vsyncadd [#allocation3], 0
      %s163 = sshll.u32 [#allocation2], 4
      %s164 = int_to_ptr.vmem [resolvable:$true] %s163
      %s165 = sshll.u32 %s5, 4
      %s166 = int_to_ptr.hbm [resolvable:$true] %s165
      %171 = dma.vmem_to_hbm [thread:$0]  %s164, 256, %s166, [#allocation3], 128, 128, 8
    $region25: #{tpu_custom_call.1} parent=1 // pred_fallthru
      _
    // Predicated region
    $region26: #{tpu_custom_call.1} parent=1 // pred_check
      _
    $region27: #{tpu_custom_call.1} parent=1 // pred_check_branch
      %173 = sbr.rel (0) target = $region29
    $region28: #{tpu_custom_call.1} parent=1 // pred_region
      %175 = dma.done [#allocation3], 256
    $region29: #{tpu_custom_call.1} parent=1 // pred_fallthru
      _
    %176 = vsyncpa [#allocation3], 1

</llo_original>
